<compile_context>
chip_gen: v7x
topology: tpu7x:2x2x1
jax: 0.10.0
libtpu: 0.0.40
codegen_flags: <defaults>
</compile_context>

<pallas_src>
import jax
import jax.numpy as jnp
from jax.experimental import pallas as pl
from jax.experimental.pallas import tpu as pltpu


class Namespace:
    """Minimal stand-in for argparse.Namespace used by the reference code."""
    pass


# ---------------------------------------------------------------------------
# Pallas kernel: identity pass-through (the abstract forward's "compute").
# ---------------------------------------------------------------------------
def _identity_kernel(x_ref, o_ref):
    # Abstract forward defines no ops; the faithful kernel body is a copy.
    o_ref[...] = x_ref[...]


# Per-buffer tile budget.  2 MiB * 2 double-buffers * (in + out) = ~8 MiB,
# which fits the scoped-VMEM default on v5e (16 MiB), v6e (32 MiB) and
# v7x (32 MiB default / 64 MiB physical) without raising vmem_limit_bytes.
_TILE_BYTES = 2 * 1024 * 1024
_MAX_COLS = 16384


def _pallas_identity_2d(x2d):
    """Tiled, pipelined identity copy over a lane-dense 2-D slab."""
    rows, cols = x2d.shape
    itemsize = jnp.dtype(x2d.dtype).itemsize

    # Row tile: multiple of 8 (sublane), sized <= _TILE_BYTES, or full rows.
    max_rows = max(8, (_TILE_BYTES // (cols * itemsize)) // 8 * 8)
    if rows <= max_rows or rows % 8 != 0:
        tile_rows = rows  # single full block (block == full dims is exempt)
    else:
        tile_rows = max_rows
        while rows % tile_rows != 0:  # keep the grid exact (no remainder tile)
            tile_rows -= 8

    grid = (rows // tile_rows,)

    return pl.pallas_call(
        _identity_kernel,
        out_shape=jax.ShapeDtypeStruct((rows, cols), x2d.dtype),
        grid=grid,
        in_specs=[pl.BlockSpec((tile_rows, cols), lambda i: (i, 0))],
        out_specs=pl.BlockSpec((tile_rows, cols), lambda i: (i, 0)),
        input_output_aliases={0: 0},  # output written in place over the input
        compiler_params=pltpu.CompilerParams(
            dimension_semantics=("parallel",),
        ),
    )(x2d)


def _pallas_identity_whole(x):
    """Fallback: single full-shape block for sizes not divisible by 128."""
    nd = x.ndim
    return pl.pallas_call(
        _identity_kernel,
        out_shape=jax.ShapeDtypeStruct(x.shape, x.dtype),
        grid=(1,),
        in_specs=[pl.BlockSpec(x.shape, lambda i: (0,) * nd)],
        out_specs=pl.BlockSpec(x.shape, lambda i: (0,) * nd),
        input_output_aliases={0: 0},
        compiler_params=pltpu.CompilerParams(
            dimension_semantics=("arbitrary",),
        ),
    )(x)


def _pick_lane_dense_cols(n):
    """Widest multiple-of-128 divisor of n (<= _MAX_COLS), preferring a row
    count that is a multiple of 8.  Returns None if n is not a 128-multiple."""
    best_any = None
    best_sublane = None
    cols = 128
    while cols <= min(n, _MAX_COLS):
        if n % cols == 0:
            best_any = cols
            if (n // cols) % 8 == 0:
                best_sublane = cols
        cols += 128
    return best_sublane if best_sublane is not None else best_any


# ---------------------------------------------------------------------------
# ModelBuilder: JAX/Pallas port of the abstract PyTorch base class.
# ---------------------------------------------------------------------------
class ModelBuilder:
    """
    Abstract class that lays out the framework for defining new models
    (JAX / Pallas version of the PyTorch reference).
    """

    def __init__(self, default_options, options=None):
        self.default_options = default_options
        if options is None:
            options = Namespace()
        self.options = options
        self.verify_options()
        self.generate_network()

    def verify_options(self):
        """Ensure all necessary options exist and are int-valued."""
        for k, v in self.default_options.items():
            try:
                if type(getattr(self.options, k)) != int:
                    setattr(self.options, k, v)
            except AttributeError:
                print(f'option {k} missing, using default value:{v}')
                setattr(self.options, k, v)
        return

    def generate_network(self):
        """
        Abstract in the reference: defines no parameters / layers.
        Deterministic parameter init would go here in a concrete subclass.
        """
        return

    def forward(self, inp):
        """
        The reference forward performs no computation.  The input is routed
        through a Pallas TPU identity-copy kernel (output aliased onto the
        input, tiled and pipelined) and returned unchanged.
        """
        if inp.ndim == 0 or inp.size == 0:
            return inp  # nothing to copy; reference forward is a no-op anyway

        n = inp.size
        cols = _pick_lane_dense_cols(n)
        if cols is None:
            # Element count not 128-divisible: copy it as one full-shape block.
            return _pallas_identity_whole(inp)

        orig_shape = inp.shape
        # Contiguous row-major reshape: no padding / concatenation / slicing,
        # so no extra HBM passes around the mem-bound copy kernel.
        x2d = inp.reshape(n // cols, cols)
        y2d = _pallas_identity_2d(x2d)
        return y2d.reshape(orig_shape)

    def __call__(self, inp):
        return self.forward(inp)


if __name__ == "__main__":
    # Deterministic small input consistent with a generic NCHW model input.
    key = jax.random.PRNGKey(0)
    x = jax.random.normal(key, (2, 4, 16, 16), dtype=jnp.float32)  # layout: NCHW

    default_options = {"hidden": 32, "layers": 2}
    model = ModelBuilder(default_options)

    y = model(x)
    y = jax.block_until_ready(y)

    # Sanity check: abstract forward = identity pass-through of the input.
    assert y.shape == x.shape and y.dtype == x.dtype
    assert bool(jnp.allclose(y, x))
    print("KERNEL_OK")
</pallas_src>

<mosaic_0001>
module attributes {stable_mosaic.version = 11 : i64} {
  func.func @_identity_kernel(%arg0: i32, %arg1: memref<8x256xf32, #tpu.memory_space<vmem>>, %arg2: memref<8x256xf32, #tpu.memory_space<vmem>>) attributes {dimension_semantics = [#tpu.dimension_semantics<parallel>], iteration_bounds = array<i64: 1>, scalar_prefetch = 0 : i64, scratch_operands = 0 : i64, tpu.core_type = #tpu.core_type<tc>, window_params = [{transform_indices = @transform_0, window_bounds = array<i64: 8, 256>}, {transform_indices = @transform_1, window_bounds = array<i64: 8, 256>}]} {
    %c0 = arith.constant 0 : index
    %c0_0 = arith.constant 0 : index
    %0 = vector.load %arg1[%c0, %c0_0] : memref<8x256xf32, #tpu.memory_space<vmem>>, vector<8x256xf32>
    %c0_1 = arith.constant 0 : index
    %c0_2 = arith.constant 0 : index
    %1 = vector.load %arg2[%c0_1, %c0_2] : memref<8x256xf32, #tpu.memory_space<vmem>>, vector<8x256xf32>
    tpu.vector_store %arg2[%c0_1, %c0_2], %0 {strides = array<i32>} : memref<8x256xf32, #tpu.memory_space<vmem>>, vector<8x256xf32>,
    return
  }
  func.func @transform_0(%arg0: i32) -> (i32, i32) {
    %c0_i32 = arith.constant 0 : i32
    %c0_i32_0 = arith.constant 0 : i32
    return %arg0, %c0_i32 : i32, i32
  }
  func.func @transform_1(%arg0: i32) -> (i32, i32) {
    %c0_i32 = arith.constant 0 : i32
    %c0_i32_0 = arith.constant 0 : i32
    return %arg0, %c0_i32 : i32, i32
  }
}

</mosaic_0001>

<llo_original>
// kernel: tpu_custom_call.1
$region0: #{tpu_custom_call.1}
  #allocation0 [shape = 'u32[]', space=smem, size = 0x4, offset = 0x4, fixed_abs, tag = 'smem constant byte address 0x4 - core index']
  #allocation1 [shape = 'u32[144,128]{1,0:T(1,128)}', space=vmem, size = 0x12000, scoped, tag = 'internal scratch']
  %s0 = inlined_call_operand.hbm [shape: f32[8,256], index: 0, kind: input, shape index: {}, may-alias: {0,1}]
  %s1 = inlined_call_operand.hbm [shape: f32[8,256], index: 1, kind: output, shape index: {}, may-alias: {0,1}]
  %s2 = sld [smem:[#allocation0]]
  $region18: #{tpu_custom_call.1} parent=0
    _
  %s4 = ssub.s32 1, %s2
  %s5 = scalar_select 0, %s4, %s2
  $region1: #{tpu_custom_call.1} parent=0
    #allocation2 [shape = 'u8[8192]{0}', space=vmem, size = 0x2000, scoped, tag = 'input window, operand 0, single buffered']
    #allocation3 [shape = 's32[1]{0}', space=sflag, size = 0x4, scoped, tag = 'scoped memory for tpu_custom_call.1']
    #allocation4 [shape = 's32[1]{0}', space=sflag, size = 0x4, scoped, tag = 'scoped memory for tpu_custom_call.1']
    #allocation5 [shape = 'u8[8192]{0}', space=vmem, size = 0x2000, scoped, tag = 'output window, operand 0, single buffered']
    %6 = vsyncpa [#allocation3], 0
    %7 = vsyncpa [#allocation4], 0
    // Predicated region
    $region2: #{tpu_custom_call.1} parent=1 // pred_check
      _
    $region3: #{tpu_custom_call.1} parent=1 // pred_check_branch
      %9 = sbr.rel (0) target = $region5
    $region4: #{tpu_custom_call.1} parent=1 // pred_region
      %s11 = ssub.s32 256, 256
      %12 = vsyncadd [#allocation3], %s11
      %s14 = sshll.u32 [#allocation2], 4
      %s15 = int_to_ptr.vmem [resolvable:$true] %s14
      %17 = dma.hbm_to_vmem [thread:$0]  %s0, 256, %s15, [#allocation3]
    $region5: #{tpu_custom_call.1} parent=1 // pred_fallthru
      _
    // Predicated region
    $region6: #{tpu_custom_call.1} parent=1 // pred_check
      _
    $region7: #{tpu_custom_call.1} parent=1 // pred_check_branch
      %19 = sbr.rel (0) target = $region9
    $region8: #{tpu_custom_call.1} parent=1 // pred_region
      %20 = dma.done [#allocation3], 256
    $region9: #{tpu_custom_call.1} parent=1 // pred_fallthru
      _
    %v21 = vld [vmem:[#allocation2] sm:$0xff]
    %v22 = vld [vmem:[#allocation2 + $0x8] sm:$0xff]
    %23 = vst [vmem:[#allocation5] sm:$0xff] %v21
    %24 = vst [vmem:[#allocation5 + $0x8] sm:$0xff] %v22
    // Predicated region
    $region10: #{tpu_custom_call.1} parent=1 // pred_check
      _
    $region11: #{tpu_custom_call.1} parent=1 // pred_check_branch
      %26 = sbr.rel (0) target = $region13
    $region12: #{tpu_custom_call.1} parent=1 // pred_region
      %s28 = ssub.s32 256, 256
      %29 = vsyncadd [#allocation4], %s28
      %s31 = sshll.u32 [#allocation5], 4
      %s32 = int_to_ptr.vmem [resolvable:$true] %s31
      %34 = dma.vmem_to_hbm [thread:$0]  %s32, 256, %s1, [#allocation4]
    $region13: #{tpu_custom_call.1} parent=1 // pred_fallthru
      _
    // Predicated region
    $region14: #{tpu_custom_call.1} parent=1 // pred_check
      _
    $region15: #{tpu_custom_call.1} parent=1 // pred_check_branch
      %36 = sbr.rel (0) target = $region17
    $region16: #{tpu_custom_call.1} parent=1 // pred_region
      %37 = dma.done [#allocation4], 256
    $region17: #{tpu_custom_call.1} parent=1 // pred_fallthru
      _
    %38 = vsyncpa [#allocation3], 1
    %39 = vsyncpa [#allocation4], 1

</llo_original>
